<compile_context>
chip_gen: v7x
topology: tpu7x:2x2x1
jax: 0.10.0
libtpu: 0.0.40
codegen_flags: <defaults>
</compile_context>

<pallas_src>
import jax
import jax.numpy as jnp
from jax.experimental import pallas as pl
from jax.experimental.pallas import tpu as pltpu


def _round_up(x, m):
    return (x + m - 1) // m * m


def _critic_kernel(state_ref, action_ref, w1s_ref, w1a_ref, b1_ref,
                   w2_ref, b2_ref, w3_ref, b3_ref, q_ref):
    # fc1: torch's `cat([state, action], 1) @ W1` computed as a split matmul,
    # so the concatenation is never materialized anywhere.
    s = state_ref[...].astype(jnp.bfloat16)
    a = action_ref[...].astype(jnp.bfloat16)
    h1 = jnp.dot(s, w1s_ref[...], preferred_element_type=jnp.float32)
    h1 = h1 + jnp.dot(a, w1a_ref[...], preferred_element_type=jnp.float32)
    h1 = jnp.maximum(h1 + b1_ref[...], 0.0)                    # bias+ReLU in f32

    # fc2
    h2 = jnp.dot(h1.astype(jnp.bfloat16), w2_ref[...],
                 preferred_element_type=jnp.float32)
    h2 = jnp.maximum(h2 + b2_ref[...], 0.0)

    # q1 (fc2 -> 1): VPU multiply + XLU lane-reduce; avoids a wasted N=1 MXU
    # pass and its result-FIFO drain.  Kept f32 end-to-end.
    q = jnp.sum(h2 * w3_ref[...], axis=-1, keepdims=True) + b3_ref[...]
    # NOTE: output stays (B, 1); a fully lane-dense (B,) output would need a
    # sublane->lane relayout of the reduce result — kept 2D for robustness.
    q_ref[...] = q.astype(q_ref.dtype)


def critic_forward(state, action, params, *, tile_b=512):
    """state: (B, input_dims), action: (B, n_actions) -> q: (B, 1)."""
    w1, b1, w2, b2, w3, b3 = params
    B, input_dims = state.shape
    n_actions = action.shape[1]
    fc1 = w1.shape[1]
    fc2 = w2.shape[1]

    # Split w1 (so no concat is needed) and cast matmul weights to bf16.
    w1s = w1[:input_dims].astype(jnp.bfloat16)          # (input_dims, fc1)
    w1a = w1[input_dims:].astype(jnp.bfloat16)          # (n_actions, fc1)
    w2b = w2.astype(jnp.bfloat16)                        # (fc1, fc2)
    w3r = w3.reshape(1, fc2).astype(jnp.float32)         # row vector for VPU layer
    b3r = b3.reshape(1, 1).astype(jnp.float32)

    # Batch tile: multiple of 8 sublanes; pad batch so the grid divides evenly
    # (skipped when B already divides — padded rows are sliced off at the end).
    tb = min(tile_b, _round_up(B, 8))
    b_pad = _round_up(B, tb)
    if b_pad != B:
        state = jnp.pad(state, ((0, b_pad - B), (0, 0)))
        action = jnp.pad(action, ((0, b_pad - B), (0, 0)))

    const2 = lambda i: (0, 0)
    q = pl.pallas_call(
        _critic_kernel,
        out_shape=jax.ShapeDtypeStruct((b_pad, 1), jnp.float32),
        grid_spec=pltpu.PrefetchScalarGridSpec(
            num_scalar_prefetch=0,
            grid=(b_pad // tb,),
            in_specs=[
                pl.BlockSpec((tb, input_dims), lambda i: (i, 0)),   # state tile
                pl.BlockSpec((tb, n_actions), lambda i: (i, 0)),    # action tile
                pl.BlockSpec((input_dims, fc1), const2),            # w1_state (resident)
                pl.BlockSpec((n_actions, fc1), const2),             # w1_action (resident)
                pl.BlockSpec((1, fc1), const2),                     # b1
                pl.BlockSpec((fc1, fc2), const2),                   # w2 (resident)
                pl.BlockSpec((1, fc2), const2),                     # b2
                pl.BlockSpec((1, fc2), const2),                     # w3 row
                pl.BlockSpec((1, 1), const2),                       # b3
            ],
            out_specs=pl.BlockSpec((tb, 1), lambda i: (i, 0)),
        ),
        compiler_params=pltpu.CompilerParams(
            dimension_semantics=("parallel",),
        ),
    )(state, action, w1s, w1a, b1, w2b, b2, w3r, b3r)
    return q[:B]


def init_params(key, input_dims, n_actions, fc1_dims, fc2_dims):
    """Deterministic init mimicking torch.nn.Linear (U[-1/sqrt(fan_in), +])."""
    def linear(key, fan_in, fan_out):
        kw, kb = jax.random.split(key)
        bound = 1.0 / jnp.sqrt(jnp.float32(fan_in))
        w = jax.random.uniform(kw, (fan_in, fan_out), jnp.float32, -bound, bound)
        b = jax.random.uniform(kb, (1, fan_out), jnp.float32, -bound, bound)
        return w, b

    k1, k2, k3 = jax.random.split(key, 3)
    w1, b1 = linear(k1, input_dims + n_actions, fc1_dims)   # combined, torch-style
    w2, b2 = linear(k2, fc1_dims, fc2_dims)
    w3, b3 = linear(k3, fc2_dims, 1)
    return (w1, b1, w2, b2, w3, b3)


def _reference_bf16(state, action, params):
    """Plain-JAX reference mirroring the kernel's bf16-matmul/f32-accumulate math."""
    w1, b1, w2, b2, w3, b3 = params
    d = state.shape[1]
    h1 = (jnp.dot(state.astype(jnp.bfloat16), w1[:d].astype(jnp.bfloat16),
                  preferred_element_type=jnp.float32)
          + jnp.dot(action.astype(jnp.bfloat16), w1[d:].astype(jnp.bfloat16),
                    preferred_element_type=jnp.float32))
    h1 = jnp.maximum(h1 + b1, 0.0)
    h2 = jnp.dot(h1.astype(jnp.bfloat16), w2.astype(jnp.bfloat16),
                 preferred_element_type=jnp.float32)
    h2 = jnp.maximum(h2 + b2, 0.0)
    return h2 @ w3 + b3


def _reference_f32(state, action, params):
    """Exact f32 math of the PyTorch module."""
    w1, b1, w2, b2, w3, b3 = params
    x = jnp.concatenate([state, action], axis=1)
    h1 = jnp.maximum(x @ w1 + b1, 0.0)
    h2 = jnp.maximum(h1 @ w2 + b2, 0.0)
    return h2 @ w3 + b3


if __name__ == "__main__":
    # Small shapes consistent with the module; fc dims chosen lane-aligned (128).
    batch, input_dims, n_actions, fc1_dims, fc2_dims = 2, 8, 4, 128, 128

    key = jax.random.PRNGKey(0)
    k_state, k_action, k_params = jax.random.split(key, 3)

    state = jax.random.normal(k_state, (batch, input_dims), jnp.float32)
    action = jax.random.normal(k_action, (batch, n_actions), jnp.float32)
    params = init_params(k_params, input_dims, n_actions, fc1_dims, fc2_dims)

    q = critic_forward(state, action, params)
    q = jax.block_until_ready(q)
    assert q.shape == (batch, 1)

    # Tight check against a reference using the same bf16 matmul path.
    ref_bf16 = _reference_bf16(state, action, params)
    assert jnp.allclose(q, ref_bf16, atol=5e-3, rtol=5e-3), (q, ref_bf16)

    # Looser sanity check against the exact f32 PyTorch-equivalent math.
    ref_f32 = _reference_f32(state, action, params)
    assert jnp.allclose(q, ref_f32, atol=5e-2, rtol=5e-2), (q, ref_f32)

    # TODO(synk): SAC's twin/target critics could be fused into one pallas_call
    # (stack weights on a leading dim) to amortize launch overhead further.
    print("KERNEL_OK")
</pallas_src>

<mosaic_0001>
module attributes {stable_mosaic.version = 11 : i64} {
  func.func @_critic_kernel(%arg0: i32, %arg1: memref<8x8xf32, #tpu.memory_space<vmem>>, %arg2: memref<8x4xf32, #tpu.memory_space<vmem>>, %arg3: memref<8x128xbf16, #tpu.memory_space<vmem>>, %arg4: memref<4x128xbf16, #tpu.memory_space<vmem>>, %arg5: memref<1x128xf32, #tpu.memory_space<vmem>>, %arg6: memref<128x128xbf16, #tpu.memory_space<vmem>>, %arg7: memref<1x128xf32, #tpu.memory_space<vmem>>, %arg8: memref<1x128xf32, #tpu.memory_space<vmem>>, %arg9: memref<1x1xf32, #tpu.memory_space<vmem>>, %arg10: memref<8x1xf32, #tpu.memory_space<vmem>>) attributes {dimension_semantics = [#tpu.dimension_semantics<parallel>], iteration_bounds = array<i64: 1>, scalar_prefetch = 0 : i64, scratch_operands = 0 : i64, tpu.core_type = #tpu.core_type<tc>, window_params = [{transform_indices = @transform_0, window_bounds = array<i64: 8, 8>}, {transform_indices = @transform_1, window_bounds = array<i64: 8, 4>}, {pipeline_mode = #tpu.pipeline_mode<synchronous>, transform_indices = @transform_2, window_bounds = array<i64: 8, 128>}, {pipeline_mode = #tpu.pipeline_mode<synchronous>, transform_indices = @transform_3, window_bounds = array<i64: 4, 128>}, {pipeline_mode = #tpu.pipeline_mode<synchronous>, transform_indices = @transform_4, window_bounds = array<i64: 1, 128>}, {pipeline_mode = #tpu.pipeline_mode<synchronous>, transform_indices = @transform_5, window_bounds = array<i64: 128, 128>}, {pipeline_mode = #tpu.pipeline_mode<synchronous>, transform_indices = @transform_6, window_bounds = array<i64: 1, 128>}, {pipeline_mode = #tpu.pipeline_mode<synchronous>, transform_indices = @transform_7, window_bounds = array<i64: 1, 128>}, {pipeline_mode = #tpu.pipeline_mode<synchronous>, transform_indices = @transform_8, window_bounds = array<i64: 1, 1>}, {transform_indices = @transform_9, window_bounds = array<i64: 8, 1>}]} {
    %c0 = arith.constant 0 : index
    %c0_0 = arith.constant 0 : index
    %0 = vector.load %arg1[%c0, %c0_0] : memref<8x8xf32, #tpu.memory_space<vmem>>, vector<8x8xf32>
    %1 = arith.truncf %0 : vector<8x8xf32> to vector<8x8xbf16>
    %c0_1 = arith.constant 0 : index
    %c0_2 = arith.constant 0 : index
    %2 = vector.load %arg2[%c0_1, %c0_2] : memref<8x4xf32, #tpu.memory_space<vmem>>, vector<8x4xf32>
    %3 = arith.truncf %2 : vector<8x4xf32> to vector<8x4xbf16>
    %c0_3 = arith.constant 0 : index
    %c0_4 = arith.constant 0 : index
    %4 = vector.load %arg3[%c0_3, %c0_4] : memref<8x128xbf16, #tpu.memory_space<vmem>>, vector<8x128xbf16>
    %cst = arith.constant dense<0.000000e+00> : vector<8x128xf32>
    %5 = tpu.matmul %1, %4, %cst {dimension_numbers = #tpu.dot_dimension_numbers<[1], [0], [0], [1], [0, 0, 1, 1], [], []>} : vector<8x8xbf16>, vector<8x128xbf16>, vector<8x128xf32> -> vector<8x128xf32>
    %c0_5 = arith.constant 0 : index
    %c0_6 = arith.constant 0 : index
    %6 = vector.load %arg4[%c0_5, %c0_6] : memref<4x128xbf16, #tpu.memory_space<vmem>>, vector<4x128xbf16>
    %cst_7 = arith.constant dense<0.000000e+00> : vector<8x128xf32>
    %7 = tpu.matmul %3, %6, %cst_7 {dimension_numbers = #tpu.dot_dimension_numbers<[1], [0], [0], [1], [0, 0, 1, 1], [], []>} : vector<8x4xbf16>, vector<4x128xbf16>, vector<8x128xf32> -> vector<8x128xf32>
    %8 = arith.addf %5, %7 : vector<8x128xf32>
    %c0_8 = arith.constant 0 : index
    %c0_9 = arith.constant 0 : index
    %9 = vector.load %arg5[%c0_8, %c0_9] : memref<1x128xf32, #tpu.memory_space<vmem>>, vector<1x128xf32>
    %10 = vector.broadcast %9 : vector<1x128xf32> to vector<8x128xf32>
    %11 = arith.addf %8, %10 : vector<8x128xf32>
    %cst_10 = arith.constant 0.000000e+00 : f32
    %12 = vector.broadcast %cst_10 : f32 to vector<8x128xf32>
    %13 = arith.maximumf %11, %12 : vector<8x128xf32>
    %14 = arith.truncf %13 : vector<8x128xf32> to vector<8x128xbf16>
    %c0_11 = arith.constant 0 : index
    %c0_12 = arith.constant 0 : index
    %15 = vector.load %arg6[%c0_11, %c0_12] : memref<128x128xbf16, #tpu.memory_space<vmem>>, vector<128x128xbf16>
    %cst_13 = arith.constant dense<0.000000e+00> : vector<8x128xf32>
    %16 = tpu.matmul %14, %15, %cst_13 {dimension_numbers = #tpu.dot_dimension_numbers<[1], [0], [0], [1], [0, 0, 1, 1], [], []>} : vector<8x128xbf16>, vector<128x128xbf16>, vector<8x128xf32> -> vector<8x128xf32>
    %c0_14 = arith.constant 0 : index
    %c0_15 = arith.constant 0 : index
    %17 = vector.load %arg7[%c0_14, %c0_15] : memref<1x128xf32, #tpu.memory_space<vmem>>, vector<1x128xf32>
    %18 = vector.broadcast %17 : vector<1x128xf32> to vector<8x128xf32>
    %19 = arith.addf %16, %18 : vector<8x128xf32>
    %cst_16 = arith.constant 0.000000e+00 : f32
    %20 = vector.broadcast %cst_16 : f32 to vector<8x128xf32>
    %21 = arith.maximumf %19, %20 : vector<8x128xf32>
    %c0_17 = arith.constant 0 : index
    %c0_18 = arith.constant 0 : index
    %22 = vector.load %arg8[%c0_17, %c0_18] : memref<1x128xf32, #tpu.memory_space<vmem>>, vector<1x128xf32>
    %23 = vector.broadcast %22 : vector<1x128xf32> to vector<8x128xf32>
    %24 = arith.mulf %21, %23 : vector<8x128xf32>
    %cst_19 = arith.constant dense<0.000000e+00> : vector<8xf32>
    %25 = vector.multi_reduction <add>, %24, %cst_19 [1] : vector<8x128xf32> to vector<8xf32>
    %26 = vector.shape_cast %25 : vector<8xf32> to vector<8x1xf32>
    %c0_20 = arith.constant 0 : index
    %c0_21 = arith.constant 0 : index
    %27 = vector.load %arg9[%c0_20, %c0_21] : memref<1x1xf32, #tpu.memory_space<vmem>>, vector<1x1xf32>
    %28 = vector.broadcast %27 : vector<1x1xf32> to vector<8x1xf32>
    %29 = arith.addf %26, %28 : vector<8x1xf32>
    %c0_22 = arith.constant 0 : index
    %c0_23 = arith.constant 0 : index
    %30 = vector.load %arg10[%c0_22, %c0_23] : memref<8x1xf32, #tpu.memory_space<vmem>>, vector<8x1xf32>
    tpu.vector_store %arg10[%c0_22, %c0_23], %29 {strides = array<i32>} : memref<8x1xf32, #tpu.memory_space<vmem>>, vector<8x1xf32>,
    return
  }
  func.func @transform_0(%arg0: i32) -> (i32, i32) {
    %c0_i32 = arith.constant 0 : i32
    %c0_i32_0 = arith.constant 0 : i32
    return %arg0, %c0_i32 : i32, i32
  }
  func.func @transform_1(%arg0: i32) -> (i32, i32) {
    %c0_i32 = arith.constant 0 : i32
    %c0_i32_0 = arith.constant 0 : i32
    return %arg0, %c0_i32 : i32, i32
  }
  func.func @transform_2(%arg0: i32) -> (i32, i32) {
    %c0_i32 = arith.constant 0 : i32
    %c0_i32_0 = arith.constant 0 : i32
    %c0_i32_1 = arith.constant 0 : i32
    return %c0_i32, %c0_i32_0 : i32, i32
  }
  func.func @transform_3(%arg0: i32) -> (i32, i32) {
    %c0_i32 = arith.constant 0 : i32
    %c0_i32_0 = arith.constant 0 : i32
    %c0_i32_1 = arith.constant 0 : i32
    return %c0_i32, %c0_i32_0 : i32, i32
  }
  func.func @transform_4(%arg0: i32) -> (i32, i32) {
    %c0_i32 = arith.constant 0 : i32
    %c0_i32_0 = arith.constant 0 : i32
    %c0_i32_1 = arith.constant 0 : i32
    return %c0_i32, %c0_i32_0 : i32, i32
  }
  func.func @transform_5(%arg0: i32) -> (i32, i32) {
    %c0_i32 = arith.constant 0 : i32
    %c0_i32_0 = arith.constant 0 : i32
    %c0_i32_1 = arith.constant 0 : i32
    return %c0_i32, %c0_i32_0 : i32, i32
  }
  func.func @transform_6(%arg0: i32) -> (i32, i32) {
    %c0_i32 = arith.constant 0 : i32
    %c0_i32_0 = arith.constant 0 : i32
    %c0_i32_1 = arith.constant 0 : i32
    return %c0_i32, %c0_i32_0 : i32, i32
  }
  func.func @transform_7(%arg0: i32) -> (i32, i32) {
    %c0_i32 = arith.constant 0 : i32
    %c0_i32_0 = arith.constant 0 : i32
    %c0_i32_1 = arith.constant 0 : i32
    return %c0_i32, %c0_i32_0 : i32, i32
  }
  func.func @transform_8(%arg0: i32) -> (i32, i32) {
    %c0_i32 = arith.constant 0 : i32
    %c0_i32_0 = arith.constant 0 : i32
    %c0_i32_1 = arith.constant 0 : i32
    return %c0_i32, %c0_i32_0 : i32, i32
  }
  func.func @transform_9(%arg0: i32) -> (i32, i32) {
    %c0_i32 = arith.constant 0 : i32
    %c0_i32_0 = arith.constant 0 : i32
    return %arg0, %c0_i32 : i32, i32
  }
}

</mosaic_0001>

<llo_original>
// kernel: tpu_custom_call.1
$region0: #{tpu_custom_call.1}
  #allocation0 [shape = 'u32[]', space=smem, size = 0x4, offset = 0x4, fixed_abs, tag = 'smem constant byte address 0x4 - core index']
  #allocation1 [shape = 'u32[144,128]{1,0:T(1,128)}', space=vmem, size = 0x12000, scoped, tag = 'internal scratch']
  #allocation2 [shape = 'f32[1,1]{1,0:T(1,128)S(1)}', space=vmem, size = 0x200, scoped, tag = 'scoped memory for tpu_custom_call.1']
  %s0 = inlined_call_operand.vmem [shape: f32[8,8], index: 0, kind: input, shape index: {}]
  %s1 = inlined_call_operand.vmem [shape: f32[8,4], index: 1, kind: input, shape index: {}]
  %s2 = inlined_call_operand.vmem [shape: bf16[8,128], index: 2, kind: input, shape index: {}]
  %s3 = inlined_call_operand.vmem [shape: bf16[4,128], index: 3, kind: input, shape index: {}]
  %s4 = inlined_call_operand.vmem [shape: f32[1,128], index: 4, kind: input, shape index: {}]
  %s5 = inlined_call_operand.hbm [shape: bf16[128,128], index: 5, kind: input, shape index: {}]
  %s6 = inlined_call_operand.vmem [shape: f32[1,128], index: 6, kind: input, shape index: {}]
  %s7 = inlined_call_operand.vmem [shape: f32[1,128], index: 7, kind: input, shape index: {}]
  %s8 = inlined_call_operand.<no memory space> [shape: f32[1,1], index: 8, kind: input, shape index: {}]
  %s9 = inlined_call_operand.vmem [shape: f32[8,1], index: 9, kind: output, shape index: {}]
  %s10 = sld [smem:[#allocation0]]
  $region50: #{tpu_custom_call.1} parent=0
    _
  %s12 = ssub.s32 1, %s10
  %s13 = scalar_select 0, %s12, %s10
  %v14 = vstv %s8
  %15 = vst [vmem:[#allocation2] sm:$0x1] %v14
  $region1: #{tpu_custom_call.1} parent=0
    #allocation3 [shape = 'u8[32768]{0}', space=vmem, size = 0x8000, scoped, tag = 'input window, operand 5, single buffered']
    #allocation4 [shape = 's32[1]{0}', space=sflag, size = 0x4, scoped, tag = 'scoped memory for tpu_custom_call.1']
    %16 = vsyncpa [#allocation4], 0
    // Predicated region
    $region2: #{tpu_custom_call.1} parent=1 // pred_check
      _
    $region3: #{tpu_custom_call.1} parent=1 // pred_check_branch
      %18 = sbr.rel (0) target = $region5
    $region4: #{tpu_custom_call.1} parent=1 // pred_region
      _
    $region5: #{tpu_custom_call.1} parent=1 // pred_fallthru
      _
    // Predicated region
    $region6: #{tpu_custom_call.1} parent=1 // pred_check
      _
    $region7: #{tpu_custom_call.1} parent=1 // pred_check_branch
      %20 = sbr.rel (0) target = $region9
    $region8: #{tpu_custom_call.1} parent=1 // pred_region
      _
    $region9: #{tpu_custom_call.1} parent=1 // pred_fallthru
      _
    // Predicated region
    $region10: #{tpu_custom_call.1} parent=1 // pred_check
      _
    $region11: #{tpu_custom_call.1} parent=1 // pred_check_branch
      %22 = sbr.rel (0) target = $region13
    $region12: #{tpu_custom_call.1} parent=1 // pred_region
      _
    $region13: #{tpu_custom_call.1} parent=1 // pred_fallthru
      _
    // Predicated region
    $region14: #{tpu_custom_call.1} parent=1 // pred_check
      _
    $region15: #{tpu_custom_call.1} parent=1 // pred_check_branch
      %24 = sbr.rel (0) target = $region17
    $region16: #{tpu_custom_call.1} parent=1 // pred_region
      _
    $region17: #{tpu_custom_call.1} parent=1 // pred_fallthru
      _
    // Predicated region
    $region18: #{tpu_custom_call.1} parent=1 // pred_check
      _
    $region19: #{tpu_custom_call.1} parent=1 // pred_check_branch
      %26 = sbr.rel (0) target = $region21
    $region20: #{tpu_custom_call.1} parent=1 // pred_region
      _
    $region21: #{tpu_custom_call.1} parent=1 // pred_fallthru
      _
    // Predicated region
    $region22: #{tpu_custom_call.1} parent=1 // pred_check
      _
    $region23: #{tpu_custom_call.1} parent=1 // pred_check_branch
      %28 = sbr.rel (0) target = $region25
    $region24: #{tpu_custom_call.1} parent=1 // pred_region
      %s30 = ssub.s32 1024, 1024
      %31 = vsyncadd [#allocation4], %s30
      %s32 = sshll.u32 [#allocation3], 4
      %s33 = int_to_ptr.vmem [resolvable:$true] %s32
      %38 = dma.hbm_to_vmem [thread:$0]  %s5, 1024, %s33, [#allocation4], 64, 64, 4
    $region25: #{tpu_custom_call.1} parent=1 // pred_fallthru
      _
    // Predicated region
    $region26: #{tpu_custom_call.1} parent=1 // pred_check
      _
    $region27: #{tpu_custom_call.1} parent=1 // pred_check_branch
      %40 = sbr.rel (0) target = $region29
    $region28: #{tpu_custom_call.1} parent=1 // pred_region
      _
    $region29: #{tpu_custom_call.1} parent=1 // pred_fallthru
      _
    // Predicated region
    $region30: #{tpu_custom_call.1} parent=1 // pred_check
      _
    $region31: #{tpu_custom_call.1} parent=1 // pred_check_branch
      %42 = sbr.rel (0) target = $region33
    $region32: #{tpu_custom_call.1} parent=1 // pred_region
      _
    $region33: #{tpu_custom_call.1} parent=1 // pred_fallthru
      _
    // Predicated region
    $region34: #{tpu_custom_call.1} parent=1 // pred_check
      _
    $region35: #{tpu_custom_call.1} parent=1 // pred_check_branch
      %44 = sbr.rel (0) target = $region37
    $region36: #{tpu_custom_call.1} parent=1 // pred_region
      _
    $region37: #{tpu_custom_call.1} parent=1 // pred_fallthru
      _
    // Predicated region
    $region38: #{tpu_custom_call.1} parent=1 // pred_check
      _
    $region39: #{tpu_custom_call.1} parent=1 // pred_check_branch
      %46 = sbr.rel (0) target = $region41
    $region40: #{tpu_custom_call.1} parent=1 // pred_region
      %47 = dma.done [#allocation4], 1024
    $region41: #{tpu_custom_call.1} parent=1 // pred_fallthru
      _
    %v49 = vld [vmem:[%s0] sm:$0xff]
    %v50 = vpack.c.bf16 %v49, %v49
    %v51 = vld [vmem:[%s1] sm:$0xff]
    %v52 = vpack.c.bf16 %v51, %v51
    %v53 = vld [vmem:[%s2] sm:$0xf]
    %v54 = vld [vmem:[%s3] sm:$0x3]
    %vm55 = vcmask 31744
    %v57 = vsel %vm55, %v52, 0
    %vm59 = vcmask 1041408
    %v61 = vsel %vm59, %v54, 0
    %63 = vmatprep.subr.bf16.mxu0 0
    %64 = vmatpush1.bf16.msra.mxu0 %v61
    %65 = vmatprep.subr.bf16.mxu0 0
    %66 = vmatpush1.bf16.msra.mxu0 0
    %67 = vmatprep.subr.bf16.mxu0 0
    %68 = vmatpush1.bf16.msra.mxu0 0
    %69 = vmatprep.subr.bf16.mxu0 0
    %70 = vmatpush1.bf16.msra.mxu0 0
    %71 = vmatprep.subr.bf16.mxu0 0
    %72 = vmatpush1.bf16.msra.mxu0 0
    %73 = vmatprep.subr.bf16.mxu0 0
    %74 = vmatpush1.bf16.msra.mxu0 0
    %75 = vmatprep.subr.bf16.mxu0 0
    %76 = vmatpush1.bf16.msra.mxu0 0
    %77 = vmatprep.subr.bf16.mxu0 0
    %78 = vmatpush1.bf16.msra.mxu0 0
    %79 = vmatprep.subr.bf16.mxu0 0
    %80 = vmatpush1.bf16.msra.mxu0 0
    %81 = vmatprep.subr.bf16.mxu0 0
    %82 = vmatpush1.bf16.msra.mxu0 0
    %83 = vmatprep.subr.bf16.mxu0 0
    %84 = vmatpush1.bf16.msra.mxu0 0
    %85 = vmatprep.subr.bf16.mxu0 0
    %86 = vmatpush1.bf16.msra.mxu0 0
    %87 = vmatprep.subr.bf16.mxu0 0
    %88 = vmatpush1.bf16.msra.mxu0 0
    %89 = vmatprep.subr.bf16.mxu0 0
    %90 = vmatpush1.bf16.msra.mxu0 0
    %91 = vmatprep.subr.bf16.mxu0 0
    %92 = vmatpush1.bf16.msra.mxu0 0
    %93 = vmatprep.subr.bf16.mxu0 0
    %94 = vmatpush1.bf16.msra.mxu0 0
    %95 = vmatprep.mubr.bf16.mxu0 0
    %96 = vmatmul.mubr.bf16.gmra.mrb[0].mxu0 %v57
    %v97 = vpop.f32.mrb[0].mxu0
    %v98 = vadd.f32 0.0, %v97
    %v99 = vpop.f32.mrb[0].mxu0
    %v100 = vpop.f32.mrb[0].mxu0
    %v101 = vpop.f32.mrb[0].mxu0
    %102 = vdwg.mxu0
    %vm103 = vcmask 64512
    %v105 = vsel %vm103, %v50, 0
    %vm107 = vcmask 1043456
    %v109 = vsel %vm107, %v53, 0
    %111 = vmatprep.subr.bf16.mxu0 0
    %112 = vmatpush1.bf16.msra.mxu0 %v109
    %113 = vmatprep.subr.bf16.mxu0 0
    %114 = vmatpush1.bf16.msra.mxu0 0
    %115 = vmatprep.subr.bf16.mxu0 0
    %116 = vmatpush1.bf16.msra.mxu0 0
    %117 = vmatprep.subr.bf16.mxu0 0
    %118 = vmatpush1.bf16.msra.mxu0 0
    %119 = vmatprep.subr.bf16.mxu0 0
    %120 = vmatpush1.bf16.msra.mxu0 0
    %121 = vmatprep.subr.bf16.mxu0 0
    %122 = vmatpush1.bf16.msra.mxu0 0
    %123 = vmatprep.subr.bf16.mxu0 0
    %124 = vmatpush1.bf16.msra.mxu0 0
    %125 = vmatprep.subr.bf16.mxu0 0
    %126 = vmatpush1.bf16.msra.mxu0 0
    %127 = vmatprep.subr.bf16.mxu0 0
    %128 = vmatpush1.bf16.msra.mxu0 0
    %129 = vmatprep.subr.bf16.mxu0 0
    %130 = vmatpush1.bf16.msra.mxu0 0
    %131 = vmatprep.subr.bf16.mxu0 0
    %132 = vmatpush1.bf16.msra.mxu0 0
    %133 = vmatprep.subr.bf16.mxu0 0
    %134 = vmatpush1.bf16.msra.mxu0 0
    %135 = vmatprep.subr.bf16.mxu0 0
    %136 = vmatpush1.bf16.msra.mxu0 0
    %137 = vmatprep.subr.bf16.mxu0 0
    %138 = vmatpush1.bf16.msra.mxu0 0
    %139 = vmatprep.subr.bf16.mxu0 0
    %140 = vmatpush1.bf16.msra.mxu0 0
    %141 = vmatprep.subr.bf16.mxu0 0
    %142 = vmatpush1.bf16.msra.mxu0 0
    %143 = vmatprep.mubr.bf16.mxu0 0
    %144 = vmatmul.mubr.bf16.gmra.mrb[0].mxu0 %v105
    %v145 = vpop.f32.mrb[0].mxu0
    %v146 = vadd.f32 %v98, %v145
    %v147 = vpop.f32.mrb[0].mxu0
    %v148 = vpop.f32.mrb[0].mxu0
    %v149 = vpop.f32.mrb[0].mxu0
    %150 = vdwg.mxu0
    %v151 = vld [vmem:[%s4] sm:$0x1]
    %v153 = vlaneseq
    %v154 = vshrl.u32 %v153, 7
    %v155 = vsub.s32 0, %v154
    %v156 = vrot.slane %v151, %v155
    %v158 = vadd.f32 %v146, %v156
    %v159 = vmax.f32 %v158, 0.0
    %v160 = vpack.c.bf16 %v159, %v159
    %v161 = vld [vmem:[#allocation3] sm:$0xf]
    %v162 = vld [vmem:[#allocation3 + $0x4] sm:$0xf]
    %v163 = vld [vmem:[#allocation3 + $0x8] sm:$0xf]
    %v164 = vld [vmem:[#allocation3 + $0xc] sm:$0xf]
    %v165 = vld [vmem:[#allocation3 + $0x10] sm:$0xf]
    %v166 = vld [vmem:[#allocation3 + $0x14] sm:$0xf]
    %v167 = vld [vmem:[#allocation3 + $0x18] sm:$0xf]
    %v168 = vld [vmem:[#allocation3 + $0x1c] sm:$0xf]
    %v169 = vld [vmem:[#allocation3 + $0x20] sm:$0xf]
    %v170 = vld [vmem:[#allocation3 + $0x24] sm:$0xf]
    %v171 = vld [vmem:[#allocation3 + $0x28] sm:$0xf]
    %v172 = vld [vmem:[#allocation3 + $0x2c] sm:$0xf]
    %v173 = vld [vmem:[#allocation3 + $0x30] sm:$0xf]
    %v174 = vld [vmem:[#allocation3 + $0x34] sm:$0xf]
    %v175 = vld [vmem:[#allocation3 + $0x38] sm:$0xf]
    %v176 = vld [vmem:[#allocation3 + $0x3c] sm:$0xf]
    %v177 = vld [vmem:[%s6] sm:$0x1]
    %v179 = vlaneseq
    %v180 = vshrl.u32 %v179, 7
    %v181 = vsub.s32 0, %v180
    %v182 = vrot.slane %v177, %v181
    %v200 = vunpack.c.l.b16 %v161
    %v201 = vunpack.c.l.b16 %v162
    %v202 = vunpack.c.l.b16 %v163
    %v203 = vunpack.c.l.b16 %v164
    %v204 = vunpack.c.l.b16 %v165
    %v205 = vunpack.c.l.b16 %v166
    %v206 = vunpack.c.l.b16 %v167
    %v207 = vunpack.c.l.b16 %v168
    %v208 = vunpack.c.l.b16 %v169
    %v209 = vunpack.c.l.b16 %v170
    %v210 = vunpack.c.l.b16 %v171
    %v211 = vunpack.c.l.b16 %v172
    %v212 = vunpack.c.l.b16 %v173
    %v213 = vunpack.c.l.b16 %v174
    %v214 = vunpack.c.l.b16 %v175
    %v215 = vunpack.c.l.b16 %v176
    %v216 = vpack.c.b16 %v201, %v200
    %v217 = vpack.c.b16 %v203, %v202
    %v218 = vpack.c.b16 %v205, %v204
    %v219 = vpack.c.b16 %v207, %v206
    %v220 = vpack.c.b16 %v209, %v208
    %v221 = vpack.c.b16 %v211, %v210
    %v222 = vpack.c.b16 %v213, %v212
    %v223 = vpack.c.b16 %v215, %v214
    %232 = vmatprep.subr.bf16.mxu0 0
    %233 = vmatpush1.bf16.msra.mxu0 %v216
    %234 = vmatprep.subr.bf16.mxu0 0
    %235 = vmatpush1.bf16.msra.mxu0 %v217
    %236 = vmatprep.subr.bf16.mxu0 0
    %237 = vmatpush1.bf16.msra.mxu0 %v218
    %238 = vmatprep.subr.bf16.mxu0 0
    %239 = vmatpush1.bf16.msra.mxu0 %v219
    %240 = vmatprep.subr.bf16.mxu0 0
    %241 = vmatpush1.bf16.msra.mxu0 %v220
    %242 = vmatprep.subr.bf16.mxu0 0
    %243 = vmatpush1.bf16.msra.mxu0 %v221
    %244 = vmatprep.subr.bf16.mxu0 0
    %245 = vmatpush1.bf16.msra.mxu0 %v222
    %246 = vmatprep.subr.bf16.mxu0 0
    %247 = vmatpush1.bf16.msra.mxu0 %v223
    %248 = vmatprep.subr.bf16.mxu0 0
    %249 = vmatpush1.bf16.msra.mxu0 0
    %250 = vmatprep.subr.bf16.mxu0 0
    %251 = vmatpush1.bf16.msra.mxu0 0
    %252 = vmatprep.subr.bf16.mxu0 0
    %253 = vmatpush1.bf16.msra.mxu0 0
    %254 = vmatprep.subr.bf16.mxu0 0
    %255 = vmatpush1.bf16.msra.mxu0 0
    %256 = vmatprep.subr.bf16.mxu0 0
    %257 = vmatpush1.bf16.msra.mxu0 0
    %258 = vmatprep.subr.bf16.mxu0 0
    %259 = vmatpush1.bf16.msra.mxu0 0
    %260 = vmatprep.subr.bf16.mxu0 0
    %261 = vmatpush1.bf16.msra.mxu0 0
    %262 = vmatprep.subr.bf16.mxu0 0
    %263 = vmatpush1.bf16.msra.mxu0 0
    %264 = vmatprep.mubr.bf16.mxu0 0
    %265 = vmatmul.mubr.bf16.gmra.mrb[0].mxu0 %v160
    %v266 = vpop.f32.mrb[0].mxu0
    %v267 = vadd.f32 %v182, %v266
    %v268 = vpop.f32.mrb[0].mxu0
    %v269 = vpop.f32.mrb[0].mxu0
    %v270 = vpop.f32.mrb[0].mxu0
    %271 = vdwg.mxu0
    %v272 = vmax.f32 %v267, 0.0
    %v273 = vld [vmem:[%s7] sm:$0x1]
    %v275 = vlaneseq
    %v276 = vshrl.u32 %v275, 7
    %v277 = vsub.s32 0, %v276
    %v278 = vrot.slane %v273, %v277
    %v280 = vmul.f32 %v272, %v278
    %281 = vadd.xlane.f32.xlu0 %v280
    %v282 = vpop.xlane.xlu0 %281
    %v283 = vld [vmem:[#allocation2] sm:$0x1]
    %v285 = vlaneseq
    %v286 = vshrl.u32 %v285, 7
    %v287 = vsub.s32 0, %v286
    %v288 = vrot.slane %v283, %v287
    %v290 = vadd.f32 %v282, %v288
    %vm291 = vcmask 7168
    %292 = vst.msk [vmem:[%s9] sm:$0xff] %vm291, %v290
    // Predicated region
    $region42: #{tpu_custom_call.1} parent=1 // pred_check
      _
    $region43: #{tpu_custom_call.1} parent=1 // pred_check_branch
      %294 = sbr.rel (0) target = $region45
    $region44: #{tpu_custom_call.1} parent=1 // pred_region
      _
    $region45: #{tpu_custom_call.1} parent=1 // pred_fallthru
      _
    // Predicated region
    $region46: #{tpu_custom_call.1} parent=1 // pred_check
      _
    $region47: #{tpu_custom_call.1} parent=1 // pred_check_branch
      %296 = sbr.rel (0) target = $region49
    $region48: #{tpu_custom_call.1} parent=1 // pred_region
      _
    $region49: #{tpu_custom_call.1} parent=1 // pred_fallthru
      _
    %297 = vsyncpa [#allocation4], 1

</llo_original>
